<compile_context>
chip_gen: v5e
topology: v5e:2x2
jax: 0.10.0
libtpu: 0.0.40
codegen_flags: <defaults>
</compile_context>

<pallas_src>
import math

import jax
import jax.numpy as jnp
from jax.experimental import pallas as pl
from jax.experimental.pallas import tpu as pltpu


def _round_up(x, m):
    return (x + m - 1) // m * m


def _vmem_limit_bytes():
    """Generation-aware VMEM cap: ~3/4 of physical VMEM (96 MiB on v5e/v6e,
    48 MiB on v7x).  Falls back to 64 MiB if the query is unavailable."""
    try:
        cap = getattr(pltpu.get_tpu_info(), "vmem_capacity_bytes", None)
        if cap:
            return int((int(cap) * 3) // 4)
    except Exception:
        pass
    return 64 * 1024 * 1024


def _choose_vocab_tiling(n_items, target_tile=4096, min_grid_steps=4,
                         max_pad_frac=0.05):
    """Pick a lane-dense vocabulary tile.

    Keeps tile_v a multiple of 128, bounds the zero-padding waste of the
    padded vocab to max_pad_frac over the 128-aligned size, and (when the
    vocab is large enough) keeps at least min_grid_steps grid steps so the
    "parallel" scoring grid can shard across v7x's two TensorCores.
    Returns (tile_v, V_pad).
    """
    v128 = _round_up(max(n_items, 1), 128)
    need_steps = min(min_grid_steps, v128 // 128)
    best_tile, best_vpad = 128, v128            # always legal (divides v128)
    tile = 128
    while tile <= min(target_tile, v128):
        v_pad = _round_up(v128, tile)
        steps = v_pad // tile
        if steps >= need_steps and (v_pad - v128) <= max_pad_frac * v128:
            best_tile, best_vpad = tile, v_pad  # scan ascending: largest wins
        tile += 128
    return best_tile, best_vpad


# ---------------------------------------------------------------------------
# Kernel 1: message passing + GRUCell + session attention readout -> s_h
# ---------------------------------------------------------------------------
def session_kernel(emb_ref, A_ref, seg_ref, last_ref, wg_ref, w1_ref, w2_ref,
                   b2_ref, qw_ref, qb_ref, w3a_ref, w3b_ref, sh_ref):
    f32 = jnp.float32
    bf16 = jnp.bfloat16
    emb = emb_ref[...]                       # (N, H) node embeddings (f32)
    H = emb.shape[1]

    # --- GatedSessionGraphConv: "add" aggregation message passing ---------
    # m[i] = sum_{edges j->i} emb[j]  ==  A @ emb  with A[i, j] = #edges j->i
    # A is bf16 (exact integer counts); emb cast to bf16 for the MXU push,
    # accumulation stays f32.
    m = jnp.dot(A_ref[...], emb.astype(bf16), preferred_element_type=f32)

    # --- GRUCell(m, emb), bias=False (PyTorch chunk order: r, z, n) -------
    # One fused MXU push: [m | emb] (N, 2H) @ blockdiag(wih.T, whh.T) (2H, 6H)
    # -> [gi | gh] (N, 6H).  (gi and gh stay separate so the n-gate math is
    # exact: n = tanh(gi_n + r * gh_n).)
    xcat = jnp.concatenate([m, emb], axis=-1)                         # (N, 2H)
    g = jnp.dot(xcat, wg_ref[...], preferred_element_type=f32)        # (N, 6H)
    gi, gh = g[:, :3 * H], g[:, 3 * H:]
    # TODO(synk): if H is not a multiple of 128 in production, pad each gate
    # block of wg to a 128-lane boundary so these slices are vreg-aligned.
    r = jax.nn.sigmoid(gi[:, 0 * H:1 * H] + gh[:, 0 * H:1 * H])
    zg = jax.nn.sigmoid(gi[:, 1 * H:2 * H] + gh[:, 1 * H:2 * H])
    n = jnp.tanh(gi[:, 2 * H:3 * H] + r * gh[:, 2 * H:3 * H])
    v_i = (1.0 - zg) * n + zg * emb                                   # (N, H)

    # --- session readout ---------------------------------------------------
    v_i_b = v_i.astype(bf16)
    v_n = jnp.dot(last_ref[...], v_i_b, preferred_element_type=f32)   # (B, H)

    # q1 reordered: project the B session vectors first (B*H*H FLOPs), then
    # broadcast to nodes by contracting the segment mask over the B axis.
    q1s = jnp.dot(v_n, w1_ref[...], preferred_element_type=f32)       # (B, H)
    q1 = jax.lax.dot_general(
        seg_ref[...], q1s.astype(bf16),
        dimension_numbers=(((0,), (0,)), ((), ())),
        preferred_element_type=f32)                                   # (N, H)

    q2 = jnp.dot(v_i, w2_ref[...], preferred_element_type=f32) + b2_ref[...]
    sig = jax.nn.sigmoid(q1 + q2)                                     # (N, H)

    # q-projection to one logit: VPU multiply + lane reduction instead of an
    # (H, 1) matmul that wastes 127/128 MXU lanes.
    alpha = (jnp.sum(sig * qw_ref[...], axis=-1, keepdims=True)
             + qb_ref[...])                                           # (N, 1)

    s_g = jnp.dot(seg_ref[...], (alpha * v_i).astype(bf16),
                  preferred_element_type=f32)                         # (B, H)
    s_h = (jnp.dot(v_n, w3a_ref[...], preferred_element_type=f32) +
           jnp.dot(s_g, w3b_ref[...], preferred_element_type=f32))    # (B, H)
    sh_ref[...] = s_h.astype(sh_ref.dtype)


# ---------------------------------------------------------------------------
# Kernel 2: scores over the item vocabulary, tiled along the vocab axis
# ---------------------------------------------------------------------------
def score_kernel(sh_ref, eT_ref, z_ref):
    z_ref[...] = jnp.dot(sh_ref[...], eT_ref[...],
                         preferred_element_type=jnp.float32).astype(z_ref.dtype)


# ---------------------------------------------------------------------------
# One-time model prep (hoisted out of the per-forward path)
# ---------------------------------------------------------------------------
def prepare_srgnn(params, E, target_tile_v=4096):
    """Build the pre-laid-out weights once at model init:
      - fused block-diagonal GRU weight (2H, 6H)
      - transposed linear weights
      - lane-dense bf16 E.T padded to the chosen vocab tiling
    so the per-call forward never re-transposes / re-casts the embedding
    table or re-builds the GRU weight."""
    f32 = jnp.float32
    n_items, H = E.shape
    tile_v, v_pad = _choose_vocab_tiling(n_items, target_tile=target_tile_v)

    eT = jnp.zeros((H, v_pad), jnp.bfloat16).at[:, :n_items].set(
        E.T.astype(jnp.bfloat16))

    wihT = params["wih"].T.astype(f32)
    whhT = params["whh"].T.astype(f32)
    zblk = jnp.zeros((H, 3 * H), f32)
    wg = jnp.concatenate(
        [jnp.concatenate([wihT, zblk], axis=1),
         jnp.concatenate([zblk, whhT], axis=1)], axis=0)              # (2H, 6H)

    return dict(
        n_items=n_items, hidden=H, tile_v=tile_v, v_pad=v_pad,
        eT=eT, wg=wg,
        w1T=params["w1"].T.astype(f32),
        w2T=params["w2"].T.astype(f32),
        b2=params["b2"][None, :].astype(f32),
        qw=params["qw"].astype(f32),
        qb=params["qb"].reshape(1, 1).astype(f32),
        w3a=params["w3"][:, :H].T.astype(f32),     # acts on s_l (= v_n)
        w3b=params["w3"][:, H:].T.astype(f32),     # acts on s_g
        vmem_limit=_vmem_limit_bytes(),
    )


# ---------------------------------------------------------------------------
# Forward wrapper
# ---------------------------------------------------------------------------
def srgnn_forward(emb, A, seg_mask, last_mask, prepped,
                  score_dtype=jnp.float32):
    """SRGNN forward: returns (B, n_items) scores."""
    f32, bf16 = jnp.float32, jnp.bfloat16
    H = prepped["hidden"]
    n_items = prepped["n_items"]
    N = emb.shape[0]
    B = seg_mask.shape[0]

    # --- per-batch masks: pad sessions to a sublane multiple (8), store in
    # bf16 (exact for 0/1).  A in bf16 is exact while edge counts <= 256.
    B_pad = _round_up(max(B, 8), 8)
    seg_p = jnp.zeros((B_pad, N), bf16).at[:B].set(seg_mask.astype(bf16))
    last_p = jnp.zeros((B_pad, N), bf16).at[:B].set(last_mask.astype(bf16))
    A_b = A.astype(bf16)

    sess_inputs = (
        emb.astype(f32),          # (N, H)
        A_b,                      # (N, N)   bf16
        seg_p,                    # (B_pad, N) bf16
        last_p,                   # (B_pad, N) bf16
        prepped["wg"],            # (2H, 6H)
        prepped["w1T"], prepped["w2T"], prepped["b2"],
        prepped["qw"], prepped["qb"],
        prepped["w3a"], prepped["w3b"],
    )

    vmem = pl.BlockSpec(memory_space=pltpu.MemorySpace.VMEM)
    s_h = pl.pallas_call(
        session_kernel,
        out_shape=jax.ShapeDtypeStruct((B_pad, H), f32),
        in_specs=[vmem] * len(sess_inputs),
        out_specs=vmem,
        compiler_params=pltpu.CompilerParams(
            vmem_limit_bytes=prepped["vmem_limit"]),
    )(*sess_inputs)
    # TODO(synk): for large graphs (N in the thousands), tile the dense A@emb
    # aggregation over node blocks with a "parallel" grid axis (or switch to a
    # scalar-prefetched edge list) so the adjacency is never fully VMEM
    # resident — matters most on v7x's 64 MiB VMEM.

    # --- vocabulary scoring: stream pre-laid-out bf16 E.T tiles ------------
    tile_v, v_pad = prepped["tile_v"], prepped["v_pad"]
    sh_bf16 = s_h.astype(bf16)
    out_bytes = jnp.dtype(score_dtype).itemsize
    cost = pl.CostEstimate(
        flops=2 * B_pad * H * v_pad,
        transcendentals=0,
        bytes_accessed=H * v_pad * 2 + B_pad * v_pad * out_bytes + B_pad * H * 2,
    )
    z_pad = pl.pallas_call(
        score_kernel,
        out_shape=jax.ShapeDtypeStruct((B_pad, v_pad), score_dtype),
        grid=(v_pad // tile_v,),
        in_specs=[
            pl.BlockSpec((B_pad, H), lambda v: (0, 0)),      # resident s_h
            # Streamed E.T tile.  If a profile still shows exposed DMA, add
            # pipeline_mode=pl.Buffered(3) here (one extra H*tile_v*2B buffer).
            pl.BlockSpec((H, tile_v), lambda v: (0, v)),
        ],
        out_specs=pl.BlockSpec((B_pad, tile_v), lambda v: (0, v)),
        compiler_params=pltpu.CompilerParams(
            dimension_semantics=("parallel",),
            vmem_limit_bytes=prepped["vmem_limit"]),
        cost_estimate=cost,
    )(sh_bf16, prepped["eT"])

    return z_pad[:B, :n_items]


# ---------------------------------------------------------------------------
# Plain-JAX reference mirroring the PyTorch module (full f32)
# ---------------------------------------------------------------------------
def ref_forward(emb, A, seg_mask, last_mask, p, E):
    H = E.shape[1]
    m = A @ emb
    gi = m @ p["wih"].T
    gh = emb @ p["whh"].T
    r = jax.nn.sigmoid(gi[:, :H] + gh[:, :H])
    zg = jax.nn.sigmoid(gi[:, H:2 * H] + gh[:, H:2 * H])
    n = jnp.tanh(gi[:, 2 * H:] + r * gh[:, 2 * H:])
    v_i = (1.0 - zg) * n + zg * emb
    v_n = last_mask @ v_i
    v_n_rep = seg_mask.T @ v_n
    q1 = v_n_rep @ p["w1"].T
    q2 = v_i @ p["w2"].T + p["b2"]
    alpha = jax.nn.sigmoid(q1 + q2) @ p["qw"].T + p["qb"]
    s_g = seg_mask @ (alpha * v_i)
    s_h = jnp.concatenate([v_n, s_g], axis=-1) @ p["w3"].T
    return s_h @ E.T


if __name__ == "__main__":
    key = jax.random.PRNGKey(0)
    H = 32              # hidden_size
    n_items = 64        # vocabulary size
    B = 2               # sessions in the batch
    nodes_per_session = 8
    N = B * nodes_per_session

    # ----- synthetic session-graph data ------------------------------------
    k_x, k_p = jax.random.split(key)
    x = jax.random.randint(k_x, (N,), 0, n_items)                    # item ids
    batch_map = jnp.repeat(jnp.arange(B), nodes_per_session)         # node->sess

    # chain edges i -> i+1 inside each session (edge_index = [src; dst])
    src, dst = [], []
    for b in range(B):
        base = b * nodes_per_session
        for i in range(nodes_per_session - 1):
            src.append(base + i)
            dst.append(base + i + 1)
    src = jnp.array(src, jnp.int32)
    dst = jnp.array(dst, jnp.int32)

    # dense adjacency for "add" message passing: A[target, source] = #edges
    A = jnp.zeros((N, N), jnp.float32).at[dst, src].add(1.0)
    # segment-membership mask (B, N) and last-node-of-session one-hot (B, N)
    seg_mask = (batch_map[None, :] == jnp.arange(B)[:, None]).astype(jnp.float32)
    last_idx = jnp.array([(b + 1) * nodes_per_session - 1 for b in range(B)])
    last_mask = jnp.zeros((B, N), jnp.float32).at[jnp.arange(B), last_idx].set(1.0)

    # ----- deterministic parameter init (SRGNN.reset_parameters style) -----
    stdv = 1.0 / math.sqrt(H)

    def u(k, shape):
        return jax.random.uniform(k, shape, jnp.float32, -stdv, stdv)

    keys = jax.random.split(k_p, 9)
    E = u(keys[0], (n_items, H))                         # embedding table
    params = dict(
        wih=u(keys[1], (3 * H, H)),                      # GRUCell weight_ih
        whh=u(keys[2], (3 * H, H)),                      # GRUCell weight_hh
        w1=u(keys[3], (H, H)),                           # W_1 (no bias)
        w2=u(keys[4], (H, H)),                           # W_2 weight
        b2=u(keys[5], (H,)),                             # W_2 bias
        qw=u(keys[6], (1, H)),                           # q weight
        qb=u(keys[7], (1,)),                             # q bias
        w3=u(keys[8], (H, 2 * H)),                       # W_3 (no bias)
    )

    # One-time weight / embedding-table prep (model init, not per call).
    prepped = prepare_srgnn(params, E, target_tile_v=4096)

    # embedding lookup (gather) stays in plain JAX glue
    emb = E[x]

    z = srgnn_forward(emb, A, seg_mask, last_mask, prepped)
    jax.block_until_ready(z)

    z_ref = ref_forward(emb, A, seg_mask, last_mask, params, E)
    assert z.shape == (B, n_items)
    # Scoring and the mask/adjacency matmuls use bf16 operands (f32 MXU
    # accumulation) -> bf16-level tolerance.
    assert jnp.allclose(z, z_ref, rtol=2.5e-2, atol=2.5e-2), "mismatch vs reference"

    print("KERNEL_OK")
</pallas_src>

<mosaic_0001>
module attributes {stable_mosaic.version = 11 : i64} {
  func.func @session_kernel(%arg0: memref<16x32xf32, #tpu.memory_space<vmem>>, %arg1: memref<16x16xbf16, #tpu.memory_space<vmem>>, %arg2: memref<8x16xbf16, #tpu.memory_space<vmem>>, %arg3: memref<8x16xbf16, #tpu.memory_space<vmem>>, %arg4: memref<64x192xf32, #tpu.memory_space<vmem>>, %arg5: memref<32x32xf32, #tpu.memory_space<vmem>>, %arg6: memref<32x32xf32, #tpu.memory_space<vmem>>, %arg7: memref<1x32xf32, #tpu.memory_space<vmem>>, %arg8: memref<1x32xf32, #tpu.memory_space<vmem>>, %arg9: memref<1x1xf32, #tpu.memory_space<vmem>>, %arg10: memref<32x32xf32, #tpu.memory_space<vmem>>, %arg11: memref<32x32xf32, #tpu.memory_space<vmem>>, %arg12: memref<8x32xf32, #tpu.memory_space<vmem>>) attributes {dimension_semantics = [], scalar_prefetch = 0 : i64, scratch_operands = 0 : i64, tpu.core_type = #tpu.core_type<tc>} {
    %c0 = arith.constant 0 : index
    %c0_0 = arith.constant 0 : index
    %0 = vector.load %arg0[%c0, %c0_0] : memref<16x32xf32, #tpu.memory_space<vmem>>, vector<16x32xf32>
    %c0_1 = arith.constant 0 : index
    %c0_2 = arith.constant 0 : index
    %1 = vector.load %arg1[%c0_1, %c0_2] : memref<16x16xbf16, #tpu.memory_space<vmem>>, vector<16x16xbf16>
    %2 = arith.truncf %0 : vector<16x32xf32> to vector<16x32xbf16>
    %cst = arith.constant dense<0.000000e+00> : vector<16x32xf32>
    %3 = tpu.matmul %1, %2, %cst {dimension_numbers = #tpu.dot_dimension_numbers<[1], [0], [0], [1], [0, 0, 1, 1], [], []>} : vector<16x16xbf16>, vector<16x32xbf16>, vector<16x32xf32> -> vector<16x32xf32>
    %4 = tpu.concatenate %3, %0 in 1 : vector<16x32xf32>, vector<16x32xf32> -> vector<16x64xf32>
    %c0_3 = arith.constant 0 : index
    %c0_4 = arith.constant 0 : index
    %5 = vector.load %arg4[%c0_3, %c0_4] : memref<64x192xf32, #tpu.memory_space<vmem>>, vector<64x192xf32>
    %cst_5 = arith.constant dense<0.000000e+00> : vector<16x192xf32>
    %6 = tpu.matmul %4, %5, %cst_5 {dimension_numbers = #tpu.dot_dimension_numbers<[1], [0], [0], [1], [0, 0, 1, 1], [], []>} : vector<16x64xf32>, vector<64x192xf32>, vector<16x192xf32> -> vector<16x192xf32>
    %7 = vector.extract_strided_slice %6 {offsets = [0, 0], sizes = [16, 96], strides = [1, 1]} : vector<16x192xf32> to vector<16x96xf32>
    %8 = vector.extract_strided_slice %6 {offsets = [0, 96], sizes = [16, 96], strides = [1, 1]} : vector<16x192xf32> to vector<16x96xf32>
    %9 = vector.extract_strided_slice %7 {offsets = [0, 0], sizes = [16, 32], strides = [1, 1]} : vector<16x96xf32> to vector<16x32xf32>
    %10 = vector.extract_strided_slice %8 {offsets = [0, 0], sizes = [16, 32], strides = [1, 1]} : vector<16x96xf32> to vector<16x32xf32>
    %11 = arith.addf %9, %10 : vector<16x32xf32>
    %12 = arith.negf %11 : vector<16x32xf32>
    %13 = math.exp %12 : vector<16x32xf32>
    %cst_6 = arith.constant 1.000000e+00 : f32
    %14 = vector.broadcast %cst_6 : f32 to vector<16x32xf32>
    %15 = arith.addf %14, %13 : vector<16x32xf32>
    %16 = arith.divf %14, %15 : vector<16x32xf32>
    %17 = vector.extract_strided_slice %7 {offsets = [0, 32], sizes = [16, 32], strides = [1, 1]} : vector<16x96xf32> to vector<16x32xf32>
    %18 = vector.extract_strided_slice %8 {offsets = [0, 32], sizes = [16, 32], strides = [1, 1]} : vector<16x96xf32> to vector<16x32xf32>
    %19 = arith.addf %17, %18 : vector<16x32xf32>
    %20 = arith.negf %19 : vector<16x32xf32>
    %21 = math.exp %20 : vector<16x32xf32>
    %cst_7 = arith.constant 1.000000e+00 : f32
    %22 = vector.broadcast %cst_7 : f32 to vector<16x32xf32>
    %23 = arith.addf %22, %21 : vector<16x32xf32>
    %24 = arith.divf %22, %23 : vector<16x32xf32>
    %25 = vector.extract_strided_slice %7 {offsets = [0, 64], sizes = [16, 32], strides = [1, 1]} : vector<16x96xf32> to vector<16x32xf32>
    %26 = vector.extract_strided_slice %8 {offsets = [0, 64], sizes = [16, 32], strides = [1, 1]} : vector<16x96xf32> to vector<16x32xf32>
    %27 = arith.mulf %16, %26 : vector<16x32xf32>
    %28 = arith.addf %25, %27 : vector<16x32xf32>
    %29 = math.tanh %28 : vector<16x32xf32>
    %cst_8 = arith.constant 1.000000e+00 : f32
    %30 = vector.broadcast %cst_8 : f32 to vector<16x32xf32>
    %31 = arith.subf %30, %24 : vector<16x32xf32>
    %32 = arith.mulf %31, %29 : vector<16x32xf32>
    %33 = arith.mulf %24, %0 : vector<16x32xf32>
    %34 = arith.addf %32, %33 : vector<16x32xf32>
    %35 = arith.truncf %34 : vector<16x32xf32> to vector<16x32xbf16>
    %c0_9 = arith.constant 0 : index
    %c0_10 = arith.constant 0 : index
    %36 = vector.load %arg3[%c0_9, %c0_10] : memref<8x16xbf16, #tpu.memory_space<vmem>>, vector<8x16xbf16>
    %cst_11 = arith.constant dense<0.000000e+00> : vector<8x32xf32>
    %37 = tpu.matmul %36, %35, %cst_11 {dimension_numbers = #tpu.dot_dimension_numbers<[1], [0], [0], [1], [0, 0, 1, 1], [], []>} : vector<8x16xbf16>, vector<16x32xbf16>, vector<8x32xf32> -> vector<8x32xf32>
    %c0_12 = arith.constant 0 : index
    %c0_13 = arith.constant 0 : index
    %38 = vector.load %arg5[%c0_12, %c0_13] : memref<32x32xf32, #tpu.memory_space<vmem>>, vector<32x32xf32>
    %cst_14 = arith.constant dense<0.000000e+00> : vector<8x32xf32>
    %39 = tpu.matmul %37, %38, %cst_14 {dimension_numbers = #tpu.dot_dimension_numbers<[1], [0], [0], [1], [0, 0, 1, 1], [], []>} : vector<8x32xf32>, vector<32x32xf32>, vector<8x32xf32> -> vector<8x32xf32>
    %c0_15 = arith.constant 0 : index
    %c0_16 = arith.constant 0 : index
    %40 = vector.load %arg2[%c0_15, %c0_16] : memref<8x16xbf16, #tpu.memory_space<vmem>>, vector<8x16xbf16>
    %41 = arith.truncf %39 : vector<8x32xf32> to vector<8x32xbf16>
    %cst_17 = arith.constant dense<0.000000e+00> : vector<16x32xf32>
    %42 = tpu.matmul %40, %41, %cst_17 {dimension_numbers = #tpu.dot_dimension_numbers<[0], [0], [1], [1], [0, 1, 1, 1], [], []>} : vector<8x16xbf16>, vector<8x32xbf16>, vector<16x32xf32> -> vector<16x32xf32>
    %c0_18 = arith.constant 0 : index
    %c0_19 = arith.constant 0 : index
    %43 = vector.load %arg6[%c0_18, %c0_19] : memref<32x32xf32, #tpu.memory_space<vmem>>, vector<32x32xf32>
    %cst_20 = arith.constant dense<0.000000e+00> : vector<16x32xf32>
    %44 = tpu.matmul %34, %43, %cst_20 {dimension_numbers = #tpu.dot_dimension_numbers<[1], [0], [0], [1], [0, 0, 1, 1], [], []>} : vector<16x32xf32>, vector<32x32xf32>, vector<16x32xf32> -> vector<16x32xf32>
    %c0_21 = arith.constant 0 : index
    %c0_22 = arith.constant 0 : index
    %45 = vector.load %arg7[%c0_21, %c0_22] : memref<1x32xf32, #tpu.memory_space<vmem>>, vector<1x32xf32>
    %46 = vector.broadcast %45 : vector<1x32xf32> to vector<16x32xf32>
    %47 = arith.addf %44, %46 : vector<16x32xf32>
    %48 = arith.addf %42, %47 : vector<16x32xf32>
    %49 = arith.negf %48 : vector<16x32xf32>
    %50 = math.exp %49 : vector<16x32xf32>
    %cst_23 = arith.constant 1.000000e+00 : f32
    %51 = vector.broadcast %cst_23 : f32 to vector<16x32xf32>
    %52 = arith.addf %51, %50 : vector<16x32xf32>
    %53 = arith.divf %51, %52 : vector<16x32xf32>
    %c0_24 = arith.constant 0 : index
    %c0_25 = arith.constant 0 : index
    %54 = vector.load %arg8[%c0_24, %c0_25] : memref<1x32xf32, #tpu.memory_space<vmem>>, vector<1x32xf32>
    %55 = vector.broadcast %54 : vector<1x32xf32> to vector<16x32xf32>
    %56 = arith.mulf %53, %55 : vector<16x32xf32>
    %cst_26 = arith.constant dense<0.000000e+00> : vector<16xf32>
    %57 = vector.multi_reduction <add>, %56, %cst_26 [1] : vector<16x32xf32> to vector<16xf32>
    %58 = vector.shape_cast %57 : vector<16xf32> to vector<16x1xf32>
    %c0_27 = arith.constant 0 : index
    %c0_28 = arith.constant 0 : index
    %59 = vector.load %arg9[%c0_27, %c0_28] : memref<1x1xf32, #tpu.memory_space<vmem>>, vector<1x1xf32>
    %60 = vector.broadcast %59 : vector<1x1xf32> to vector<16x1xf32>
    %61 = arith.addf %58, %60 : vector<16x1xf32>
    %c0_29 = arith.constant 0 : index
    %c0_30 = arith.constant 0 : index
    %62 = vector.load %arg2[%c0_29, %c0_30] : memref<8x16xbf16, #tpu.memory_space<vmem>>, vector<8x16xbf16>
    %63 = vector.broadcast %61 : vector<16x1xf32> to vector<16x32xf32>
    %64 = arith.mulf %63, %34 : vector<16x32xf32>
    %65 = arith.truncf %64 : vector<16x32xf32> to vector<16x32xbf16>
    %cst_31 = arith.constant dense<0.000000e+00> : vector<8x32xf32>
    %66 = tpu.matmul %62, %65, %cst_31 {dimension_numbers = #tpu.dot_dimension_numbers<[1], [0], [0], [1], [0, 0, 1, 1], [], []>} : vector<8x16xbf16>, vector<16x32xbf16>, vector<8x32xf32> -> vector<8x32xf32>
    %c0_32 = arith.constant 0 : index
    %c0_33 = arith.constant 0 : index
    %67 = vector.load %arg10[%c0_32, %c0_33] : memref<32x32xf32, #tpu.memory_space<vmem>>, vector<32x32xf32>
    %cst_34 = arith.constant dense<0.000000e+00> : vector<8x32xf32>
    %68 = tpu.matmul %37, %67, %cst_34 {dimension_numbers = #tpu.dot_dimension_numbers<[1], [0], [0], [1], [0, 0, 1, 1], [], []>} : vector<8x32xf32>, vector<32x32xf32>, vector<8x32xf32> -> vector<8x32xf32>
    %c0_35 = arith.constant 0 : index
    %c0_36 = arith.constant 0 : index
    %69 = vector.load %arg11[%c0_35, %c0_36] : memref<32x32xf32, #tpu.memory_space<vmem>>, vector<32x32xf32>
    %cst_37 = arith.constant dense<0.000000e+00> : vector<8x32xf32>
    %70 = tpu.matmul %66, %69, %cst_37 {dimension_numbers = #tpu.dot_dimension_numbers<[1], [0], [0], [1], [0, 0, 1, 1], [], []>} : vector<8x32xf32>, vector<32x32xf32>, vector<8x32xf32> -> vector<8x32xf32>
    %71 = arith.addf %68, %70 : vector<8x32xf32>
    %c0_38 = arith.constant 0 : index
    %c0_39 = arith.constant 0 : index
    %72 = vector.load %arg12[%c0_38, %c0_39] : memref<8x32xf32, #tpu.memory_space<vmem>>, vector<8x32xf32>
    tpu.vector_store %arg12[%c0_38, %c0_39], %71 {strides = array<i32>} : memref<8x32xf32, #tpu.memory_space<vmem>>, vector<8x32xf32>,
    return
  }
}

</mosaic_0001>

<llo_original>
// kernel: tpu_custom_call.1
$region0: #{tpu_custom_call.1}
  #allocation0 [shape = 'u32[]', space=smem, size = 0x4, offset = 0x4, fixed_abs, tag = 'smem constant byte address 0x4 - core index']
  #allocation1 [shape = 'u32[72,128]{1,0:T(1,128)}', space=vmem, size = 0x9000, scoped, tag = 'internal scratch']
  #allocation2 [shape = 'f32[1,1]{1,0:T(1,128)S(1)}', space=vmem, size = 0x200, scoped, tag = 'scoped memory for tpu_custom_call.1']
  %s0 = inlined_call_operand.hbm [shape: f32[16,32], index: 0, kind: input, shape index: {}]
  %s1 = inlined_call_operand.hbm [shape: bf16[16,16], index: 1, kind: input, shape index: {}]
  %s2 = inlined_call_operand.hbm [shape: bf16[8,16], index: 2, kind: input, shape index: {}]
  %s3 = inlined_call_operand.vmem [shape: bf16[8,16], index: 3, kind: input, shape index: {}]
  %s4 = inlined_call_operand.hbm [shape: f32[64,192], index: 4, kind: input, shape index: {}]
  %s5 = inlined_call_operand.hbm [shape: f32[32,32], index: 5, kind: input, shape index: {}]
  %s6 = inlined_call_operand.hbm [shape: f32[32,32], index: 6, kind: input, shape index: {}]
  %s7 = inlined_call_operand.vmem [shape: f32[1,32], index: 7, kind: input, shape index: {}]
  %s8 = inlined_call_operand.vmem [shape: f32[1,32], index: 8, kind: input, shape index: {}]
  %s9 = inlined_call_operand.<no memory space> [shape: f32[1,1], index: 9, kind: input, shape index: {}]
  %s10 = inlined_call_operand.hbm [shape: f32[32,32], index: 10, kind: input, shape index: {}]
  %s11 = inlined_call_operand.hbm [shape: f32[32,32], index: 11, kind: input, shape index: {}]
  %s12 = inlined_call_operand.hbm [shape: f32[8,32], index: 12, kind: output, shape index: {}]
  %s13 = sld [smem:[#allocation0]]
  $region90: #{tpu_custom_call.1} parent=0
    _
  %s15 = ssub.s32 1, %s13
  %s16 = scalar_select 0, %s15, %s13
  %v17 = vstv %s9
  %18 = vst [vmem:[#allocation2] sm:$0x1] %v17
  $region1: #{tpu_custom_call.1} parent=0
    #allocation3 [shape = 'u8[8192]{0}', space=vmem, size = 0x2000, scoped, tag = 'input window, operand 0, single buffered']
    #allocation4 [shape = 's32[1]{0}', space=sflag, size = 0x4, scoped, tag = 'scoped memory for tpu_custom_call.1']
    #allocation5 [shape = 's32[1]{0}', space=sflag, size = 0x4, scoped, tag = 'scoped memory for tpu_custom_call.1']
    #allocation6 [shape = 'u8[4096]{0}', space=vmem, size = 0x1000, scoped, tag = 'input window, operand 1, single buffered']
    #allocation7 [shape = 's32[1]{0}', space=sflag, size = 0x4, scoped, tag = 'scoped memory for tpu_custom_call.1']
    #allocation8 [shape = 'u8[2048]{0}', space=vmem, size = 0x800, scoped, tag = 'input window, operand 2, single buffered']
    #allocation9 [shape = 'u8[65536]{0}', space=vmem, size = 0x10000, scoped, tag = 'input window, operand 4, single buffered']
    #allocation10 [shape = 's32[1]{0}', space=sflag, size = 0x4, scoped, tag = 'scoped memory for tpu_custom_call.1']
    #allocation11 [shape = 'u8[16384]{0}', space=vmem, size = 0x4000, scoped, tag = 'input window, operand 5, single buffered']
    #allocation12 [shape = 'u8[16384]{0}', space=vmem, size = 0x4000, scoped, tag = 'input window, operand 6, single buffered']
    #allocation13 [shape = 's32[1]{0}', space=sflag, size = 0x4, scoped, tag = 'scoped memory for tpu_custom_call.1']
    #allocation14 [shape = 'u8[16384]{0}', space=vmem, size = 0x4000, scoped, tag = 'input window, operand 10, single buffered']
    #allocation15 [shape = 'u8[16384]{0}', space=vmem, size = 0x4000, scoped, tag = 'input window, operand 11, single buffered']
    #allocation16 [shape = 's32[1]{0}', space=sflag, size = 0x4, scoped, tag = 'scoped memory for tpu_custom_call.1']
    #allocation17 [shape = 'u8[4096]{0}', space=vmem, size = 0x1000, scoped, tag = 'output window, operand 0, single buffered']
    %19 = vsyncpa [#allocation4], 0
    %20 = vsyncpa [#allocation7], 0
    %21 = vsyncpa [#allocation10], 0
    %22 = vsyncpa [#allocation13], 0
    %23 = vsyncpa [#allocation16], 0
    %24 = vsyncpa [#allocation5], 0
    // Predicated region
    $region2: #{tpu_custom_call.1} parent=1 // pred_check
      _
    $region3: #{tpu_custom_call.1} parent=1 // pred_check_branch
      %26 = sbr.rel (0) target = $region5
    $region4: #{tpu_custom_call.1} parent=1 // pred_region
      %28 = vsyncadd [#allocation4], 0
      %s29 = sshll.u32 %s0, 4
      %s30 = int_to_ptr.hbm [resolvable:$true] %s29
      %s31 = sshll.u32 [#allocation3], 4
      %s32 = int_to_ptr.vmem [resolvable:$true] %s31
      %37 = dma.hbm_to_vmem [thread:$0]  %s30, 256, %s32, [#allocation4], 128, 128, 8
    $region5: #{tpu_custom_call.1} parent=1 // pred_fallthru
      _
    // Predicated region
    $region6: #{tpu_custom_call.1} parent=1 // pred_check
      _
    $region7: #{tpu_custom_call.1} parent=1 // pred_check_branch
      %39 = sbr.rel (0) target = $region9
    $region8: #{tpu_custom_call.1} parent=1 // pred_region
      %41 = vsyncadd [#allocation7], 0
      %s42 = sshll.u32 %s1, 4
      %s43 = int_to_ptr.hbm [resolvable:$true] %s42
      %s44 = sshll.u32 [#allocation6], 4
      %s45 = int_to_ptr.vmem [resolvable:$true] %s44
      %50 = dma.hbm_to_vmem [thread:$0]  %s43, 128, %s45, [#allocation7], 64, 64, 4
    $region9: #{tpu_custom_call.1} parent=1 // pred_fallthru
      _
    // Predicated region
    $region10: #{tpu_custom_call.1} parent=1 // pred_check
      _
    $region11: #{tpu_custom_call.1} parent=1 // pred_check_branch
      %52 = sbr.rel (0) target = $region13
    $region12: #{tpu_custom_call.1} parent=1 // pred_region
      %54 = vsyncadd [#allocation7], 0
      %s56 = sshll.u32 %s2, 4
      %s57 = int_to_ptr.hbm [resolvable:$true] %s56
      %s58 = sshll.u32 [#allocation8], 4
      %s59 = int_to_ptr.vmem [resolvable:$true] %s58
      %61 = dma.hbm_to_vmem [thread:$0]  %s57, 64, %s59, [#allocation7]
    $region13: #{tpu_custom_call.1} parent=1 // pred_fallthru
      _
    // Predicated region
    $region14: #{tpu_custom_call.1} parent=1 // pred_check
      _
    $region15: #{tpu_custom_call.1} parent=1 // pred_check_branch
      %63 = sbr.rel (0) target = $region17
    $region16: #{tpu_custom_call.1} parent=1 // pred_region
      _
    $region17: #{tpu_custom_call.1} parent=1 // pred_fallthru
      _
    // Predicated region
    $region18: #{tpu_custom_call.1} parent=1 // pred_check
      _
    $region19: #{tpu_custom_call.1} parent=1 // pred_check_branch
      %65 = sbr.rel (0) target = $region21
    $region20: #{tpu_custom_call.1} parent=1 // pred_region
      %67 = vsyncadd [#allocation10], 0
      %s68 = sshll.u32 %s4, 4
      %s69 = int_to_ptr.hbm [resolvable:$true] %s68
      %s70 = sshll.u32 [#allocation9], 4
      %s71 = int_to_ptr.vmem [resolvable:$true] %s70
      %76 = dma.hbm_to_vmem [thread:$0]  %s69, 2048, %s71, [#allocation10], 256, 256, 16
    $region21: #{tpu_custom_call.1} parent=1 // pred_fallthru
      _
    // Predicated region
    $region22: #{tpu_custom_call.1} parent=1 // pred_check
      _
    $region23: #{tpu_custom_call.1} parent=1 // pred_check_branch
      %78 = sbr.rel (0) target = $region25
    $region24: #{tpu_custom_call.1} parent=1 // pred_region
      %80 = vsyncadd [#allocation10], 0
      %s81 = sshll.u32 %s5, 4
      %s82 = int_to_ptr.hbm [resolvable:$true] %s81
      %s83 = sshll.u32 [#allocation11], 4
      %s84 = int_to_ptr.vmem [resolvable:$true] %s83
      %89 = dma.hbm_to_vmem [thread:$0]  %s82, 512, %s84, [#allocation10], 128, 128, 8
    $region25: #{tpu_custom_call.1} parent=1 // pred_fallthru
      _
    // Predicated region
    $region26: #{tpu_custom_call.1} parent=1 // pred_check
      _
    $region27: #{tpu_custom_call.1} parent=1 // pred_check_branch
      %91 = sbr.rel (0) target = $region29
    $region28: #{tpu_custom_call.1} parent=1 // pred_region
      %93 = vsyncadd [#allocation13], 0
      %s94 = sshll.u32 %s6, 4
      %s95 = int_to_ptr.hbm [resolvable:$true] %s94
      %s96 = sshll.u32 [#allocation12], 4
      %s97 = int_to_ptr.vmem [resolvable:$true] %s96
      %102 = dma.hbm_to_vmem [thread:$0]  %s95, 512, %s97, [#allocation13], 128, 128, 8
    $region29: #{tpu_custom_call.1} parent=1 // pred_fallthru
      _
    // Predicated region
    $region30: #{tpu_custom_call.1} parent=1 // pred_check
      _
    $region31: #{tpu_custom_call.1} parent=1 // pred_check_branch
      %104 = sbr.rel (0) target = $region33
    $region32: #{tpu_custom_call.1} parent=1 // pred_region
      _
    $region33: #{tpu_custom_call.1} parent=1 // pred_fallthru
      _
    // Predicated region
    $region34: #{tpu_custom_call.1} parent=1 // pred_check
      _
    $region35: #{tpu_custom_call.1} parent=1 // pred_check_branch
      %106 = sbr.rel (0) target = $region37
    $region36: #{tpu_custom_call.1} parent=1 // pred_region
      _
    $region37: #{tpu_custom_call.1} parent=1 // pred_fallthru
      _
    // Predicated region
    $region38: #{tpu_custom_call.1} parent=1 // pred_check
      _
    $region39: #{tpu_custom_call.1} parent=1 // pred_check_branch
      %108 = sbr.rel (0) target = $region41
    $region40: #{tpu_custom_call.1} parent=1 // pred_region
      _
    $region41: #{tpu_custom_call.1} parent=1 // pred_fallthru
      _
    // Predicated region
    $region42: #{tpu_custom_call.1} parent=1 // pred_check
      _
    $region43: #{tpu_custom_call.1} parent=1 // pred_check_branch
      %110 = sbr.rel (0) target = $region45
    $region44: #{tpu_custom_call.1} parent=1 // pred_region
      %112 = vsyncadd [#allocation13], 0
      %s113 = sshll.u32 %s10, 4
      %s114 = int_to_ptr.hbm [resolvable:$true] %s113
      %s115 = sshll.u32 [#allocation14], 4
      %s116 = int_to_ptr.vmem [resolvable:$true] %s115
      %121 = dma.hbm_to_vmem [thread:$0]  %s114, 512, %s116, [#allocation13], 128, 128, 8
    $region45: #{tpu_custom_call.1} parent=1 // pred_fallthru
      _
    // Predicated region
    $region46: #{tpu_custom_call.1} parent=1 // pred_check
      _
    $region47: #{tpu_custom_call.1} parent=1 // pred_check_branch
      %123 = sbr.rel (0) target = $region49
    $region48: #{tpu_custom_call.1} parent=1 // pred_region
      %125 = vsyncadd [#allocation16], 0
      %s126 = sshll.u32 %s11, 4
      %s127 = int_to_ptr.hbm [resolvable:$true] %s126
      %s128 = sshll.u32 [#allocation15], 4
      %s129 = int_to_ptr.vmem [resolvable:$true] %s128
      %134 = dma.hbm_to_vmem [thread:$0]  %s127, 512, %s129, [#allocation16], 128, 128, 8
    $region49: #{tpu_custom_call.1} parent=1 // pred_fallthru
      _
    // Predicated region
    $region50: #{tpu_custom_call.1} parent=1 // pred_check
      _
    $region51: #{tpu_custom_call.1} parent=1 // pred_check_branch
      %136 = sbr.rel (0) target = $region53
    $region52: #{tpu_custom_call.1} parent=1 // pred_region
      %138 = dma.done [#allocation4], 256
    $region53: #{tpu_custom_call.1} parent=1 // pred_fallthru
      _
    // Predicated region
    $region54: #{tpu_custom_call.1} parent=1 // pred_check
      _
    $region55: #{tpu_custom_call.1} parent=1 // pred_check_branch
      %140 = sbr.rel (0) target = $region57
    $region56: #{tpu_custom_call.1} parent=1 // pred_region
      %142 = dma.done [#allocation7], 128
    $region57: #{tpu_custom_call.1} parent=1 // pred_fallthru
      _
    // Predicated region
    $region58: #{tpu_custom_call.1} parent=1 // pred_check
      _
    $region59: #{tpu_custom_call.1} parent=1 // pred_check_branch
      %144 = sbr.rel (0) target = $region61
    $region60: #{tpu_custom_call.1} parent=1 // pred_region
      %146 = dma.done [#allocation7], 64
    $region61: #{tpu_custom_call.1} parent=1 // pred_fallthru
      _
    // Predicated region
    $region62: #{tpu_custom_call.1} parent=1 // pred_check
      _
    $region63: #{tpu_custom_call.1} parent=1 // pred_check_branch
      %148 = sbr.rel (0) target = $region65
    $region64: #{tpu_custom_call.1} parent=1 // pred_region
      %150 = dma.done [#allocation10], 2048
    $region65: #{tpu_custom_call.1} parent=1 // pred_fallthru
      _
    // Predicated region
    $region66: #{tpu_custom_call.1} parent=1 // pred_check
      _
    $region67: #{tpu_custom_call.1} parent=1 // pred_check_branch
      %152 = sbr.rel (0) target = $region69
    $region68: #{tpu_custom_call.1} parent=1 // pred_region
      %154 = dma.done [#allocation10], 512
    $region69: #{tpu_custom_call.1} parent=1 // pred_fallthru
      _
    // Predicated region
    $region70: #{tpu_custom_call.1} parent=1 // pred_check
      _
    $region71: #{tpu_custom_call.1} parent=1 // pred_check_branch
      %156 = sbr.rel (0) target = $region73
    $region72: #{tpu_custom_call.1} parent=1 // pred_region
      %158 = dma.done [#allocation13], 512
    $region73: #{tpu_custom_call.1} parent=1 // pred_fallthru
      _
    // Predicated region
    $region74: #{tpu_custom_call.1} parent=1 // pred_check
      _
    $region75: #{tpu_custom_call.1} parent=1 // pred_check_branch
      %160 = sbr.rel (0) target = $region77
    $region76: #{tpu_custom_call.1} parent=1 // pred_region
      %162 = dma.done [#allocation13], 512
    $region77: #{tpu_custom_call.1} parent=1 // pred_fallthru
      _
    // Predicated region
    $region78: #{tpu_custom_call.1} parent=1 // pred_check
      _
    $region79: #{tpu_custom_call.1} parent=1 // pred_check_branch
      %164 = sbr.rel (0) target = $region81
    $region80: #{tpu_custom_call.1} parent=1 // pred_region
      %166 = dma.done [#allocation16], 512
    $region81: #{tpu_custom_call.1} parent=1 // pred_fallthru
      _
    %v168 = vld [vmem:[#allocation3] sm:$0xff]
    %v169 = vld [vmem:[#allocation3 + $0x8] sm:$0xff]
    %v170 = vld [vmem:[#allocation6] sm:$0xf]
    %v171 = vld [vmem:[#allocation6 + $0x4] sm:$0xf]
    %v172 = vpack.c.bf16 %v169, %v168
    %v175 = vunpack.c.l.b16 %v170
    %v176 = vunpack.c.l.b16 %v171
    %v177 = vpack.c.b16 %v176, %v175
    %vm178 = vcmask 130048
    %v180 = vsel %vm178, %v177, 0
    %182 = vmatpush.bf16.msra.mxu0 0
    %183 = vmatpush.bf16.msra.mxu0 0
    %184 = vmatpush.bf16.msra.mxu0 0
    %185 = vmatpush.bf16.msra.mxu0 0
    %186 = vmatpush.bf16.msra.mxu0 0
    %187 = vmatpush.bf16.msra.mxu0 0
    %188 = vmatpush.bf16.msra.mxu0 0
    %189 = vmatpush.bf16.msra.mxu0 %v172
    %190 = vmatmul.bf16.gmra.mxu0 %v180
    %v191 = vpop.f32.mrf.mxu0
    %v192 = vadd.f32 0.0, %v191
    %v193 = vpop.f32.mrf.mxu0
    %v194 = vadd.f32 0.0, %v193
    %195 = vdwg.mxu0
    %198 = vrot.lane.b32.xlu0 %v168, 32
    %v199 = vpop.permute.xlu0 %198
    %200 = vrot.lane.b32.xlu0 %v169, 32
    %v201 = vpop.permute.xlu0 %200
    %vm204 = vcmask 261120
    %v205 = vsel %vm204, %v192, %v199
    %v206 = vsel %vm204, %v194, %v201
    %v207 = vld [vmem:[#allocation9] sm:$0xff]
    %v208 = vld [vmem:[#allocation9 + $0x8] sm:$0xff]
    %v209 = vld [vmem:[#allocation9 + $0x10] sm:$0xff]
    %v210 = vld [vmem:[#allocation9 + $0x18] sm:$0xff]
    %v211 = vld [vmem:[#allocation9 + $0x20] sm:$0xff]
    %v212 = vld [vmem:[#allocation9 + $0x28] sm:$0xff]
    %v213 = vld [vmem:[#allocation9 + $0x30] sm:$0xff]
    %v214 = vld [vmem:[#allocation9 + $0x38] sm:$0xff]
    %v215 = vld [vmem:[#allocation9 + $0x40] sm:$0xff]
    %v216 = vld [vmem:[#allocation9 + $0x48] sm:$0xff]
    %v217 = vld [vmem:[#allocation9 + $0x50] sm:$0xff]
    %v218 = vld [vmem:[#allocation9 + $0x58] sm:$0xff]
    %v219 = vld [vmem:[#allocation9 + $0x60] sm:$0xff]
    %v220 = vld [vmem:[#allocation9 + $0x68] sm:$0xff]
    %v221 = vld [vmem:[#allocation9 + $0x70] sm:$0xff]
    %v222 = vld [vmem:[#allocation9 + $0x78] sm:$0xff]
    %vm223 = vcmask 523264
    %v225 = vsel %vm223, %v205, 0
    %v228 = vsel %vm223, %v206, 0
    %230 = vmatpush.msra.mxu0 0.0
    %231 = vmatpush.msra.mxu0 0.0
    %232 = vmatpush.msra.mxu0 0.0
    %233 = vmatpush.msra.mxu0 0.0
    %234 = vmatpush.msra.mxu0 0.0
    %235 = vmatpush.msra.mxu0 0.0
    %236 = vmatpush.msra.mxu0 0.0
    %237 = vmatpush.msra.mxu0 0.0
    %238 = vmatpush.msra.mxu0 %v221
    %239 = vmatpush.msra.mxu0 %v219
    %240 = vmatpush.msra.mxu0 %v217
    %241 = vmatpush.msra.mxu0 %v215
    %242 = vmatpush.msra.mxu0 %v213
    %243 = vmatpush.msra.mxu0 %v211
    %244 = vmatpush.msra.mxu0 %v209
    %245 = vmatpush.msra.mxu0 %v207
    %246 = vmatmul.f32.gmra.mxu0 %v225
    %v247 = vpop.f32.mrf.mxu0
    %v248 = vadd.f32 0.0, %v247
    %249 = vmatmul.f32.gmra.mxu0 %v228
    %v250 = vpop.f32.mrf.mxu0
    %v251 = vadd.f32 0.0, %v250
    %252 = vdwg.mxu0
    %253 = vmatpush.msra.mxu0 0.0
    %254 = vmatpush.msra.mxu0 0.0
    %255 = vmatpush.msra.mxu0 0.0
    %256 = vmatpush.msra.mxu0 0.0
    %257 = vmatpush.msra.mxu0 0.0
    %258 = vmatpush.msra.mxu0 0.0
    %259 = vmatpush.msra.mxu0 0.0
    %260 = vmatpush.msra.mxu0 0.0
    %261 = vmatpush.msra.mxu0 %v222
    %262 = vmatpush.msra.mxu0 %v220
    %263 = vmatpush.msra.mxu0 %v218
    %264 = vmatpush.msra.mxu0 %v216
    %265 = vmatpush.msra.mxu0 %v214
    %266 = vmatpush.msra.mxu0 %v212
    %267 = vmatpush.msra.mxu0 %v210
    %268 = vmatpush.msra.mxu0 %v208
    %269 = vmatmul.f32.gmra.mxu0 %v225
    %v270 = vpop.f32.mrf.mxu0
    %v271 = vadd.f32 0.0, %v270
    %272 = vmatmul.f32.gmra.mxu0 %v228
    %v273 = vpop.f32.mrf.mxu0
    %v274 = vadd.f32 0.0, %v273
    %275 = vdwg.mxu0
    %278 = vrot.lane.b32.xlu0 %v248, 32
    %v279 = vpop.permute.xlu0 %278
    %280 = vrot.lane.b32.xlu0 %v251, 32
    %v281 = vpop.permute.xlu0 %280
    %v284 = vadd.f32 %v248, %v279
    %v285 = vadd.f32 %v251, %v281
    %v286 = vxor.u32 %v284, 2147483648
    %v287 = vxor.u32 %v285, 2147483648
    %v288 = vmul.f32 %v286, 1.442695
    %v289 = vpow.pop %v288
    %v290 = vmul.f32 %v287, 1.442695
    %v291 = vpow.pop %v290
    %v292 = vadd.f32 %v289, 1.0
    %v293 = vadd.f32 %v291, 1.0
    %v294 = vrcp.pop %v292
    %v295 = vmul.f32 %v292, %v294
    %v296 = vsub.f32 1.0, %v295
    %v297 = vmul.f32 %v294, %v296
    %v298 = vadd.f32 %v294, %v297
    %vm299 = vweird.f32 %v292
    %vm300 = vweird.f32 %v294
    %vm301 = vmor %vm299, %vm300
    %v302 = vsel %vm301, %v294, %v298
    %v303 = vand.u32 2147483647, %v292
    %vm304 = vcmp.eq.f32.partialorder %v303, 8.507059e+37
    %v305 = vand.u32 %v292, 2147483648
    %v306 = vor.u32 1.1754944e-38, %v305
    %v307 = vsel %vm304, %v306, %v302
    %v308 = vmul.f32 1.0, %v307
    %v309 = vrcp.pop %v293
    %v310 = vmul.f32 %v293, %v309
    %v311 = vsub.f32 1.0, %v310
    %v312 = vmul.f32 %v309, %v311
    %v313 = vadd.f32 %v309, %v312
    %vm314 = vweird.f32 %v293
    %vm315 = vweird.f32 %v309
    %vm316 = vmor %vm314, %vm315
    %v317 = vsel %vm316, %v309, %v313
    %v318 = vand.u32 2147483647, %v293
    %vm319 = vcmp.eq.f32.partialorder %v318, 8.507059e+37
    %v320 = vand.u32 %v293, 2147483648
    %v321 = vor.u32 1.1754944e-38, %v320
    %v322 = vsel %vm319, %v321, %v317
    %v323 = vmul.f32 1.0, %v322
    %326 = vrot.lane.b32.xlu0 %v271, 32
    %v327 = vpop.permute.xlu0 %326
    %328 = vrot.lane.b32.xlu0 %v274, 32
    %v329 = vpop.permute.xlu0 %328
    %v332 = vadd.f32 %v248, %v327
    %v333 = vadd.f32 %v251, %v329
    %v334 = vxor.u32 %v332, 2147483648
    %v335 = vxor.u32 %v333, 2147483648
    %v336 = vmul.f32 %v334, 1.442695
    %v337 = vpow.pop %v336
    %v338 = vmul.f32 %v335, 1.442695
    %v339 = vpow.pop %v338
    %v340 = vadd.f32 %v337, 1.0
    %v341 = vadd.f32 %v339, 1.0
    %v342 = vrcp.pop %v340
    %v343 = vmul.f32 %v340, %v342
    %v344 = vsub.f32 1.0, %v343
    %v345 = vmul.f32 %v342, %v344
    %v346 = vadd.f32 %v342, %v345
    %vm347 = vweird.f32 %v340
    %vm348 = vweird.f32 %v342
    %vm349 = vmor %vm347, %vm348
    %v350 = vsel %vm349, %v342, %v346
    %v351 = vand.u32 2147483647, %v340
    %vm352 = vcmp.eq.f32.partialorder %v351, 8.507059e+37
    %v353 = vand.u32 %v340, 2147483648
    %v354 = vor.u32 1.1754944e-38, %v353
    %v355 = vsel %vm352, %v354, %v350
    %v356 = vmul.f32 1.0, %v355
    %v357 = vrcp.pop %v341
    %v358 = vmul.f32 %v341, %v357
    %v359 = vsub.f32 1.0, %v358
    %v360 = vmul.f32 %v357, %v359
    %v361 = vadd.f32 %v357, %v360
    %vm362 = vweird.f32 %v341
    %vm363 = vweird.f32 %v357
    %vm364 = vmor %vm362, %vm363
    %v365 = vsel %vm364, %v357, %v361
    %v366 = vand.u32 2147483647, %v341
    %vm367 = vcmp.eq.f32.partialorder %v366, 8.507059e+37
    %v368 = vand.u32 %v341, 2147483648
    %v369 = vor.u32 1.1754944e-38, %v368
    %v370 = vsel %vm367, %v369, %v365
    %v371 = vmul.f32 1.0, %v370
    %372 = vrot.lane.b32.xlu0 %v271, 96
    %v373 = vpop.permute.xlu0 %372
    %374 = vrot.lane.b32.xlu0 %v274, 96
    %v375 = vpop.permute.xlu0 %374
    %v378 = vmul.f32 %v308, %v373
    %v379 = vmul.f32 %v323, %v375
    %382 = vrot.lane.b32.xlu0 %v378, 64
    %v383 = vpop.permute.xlu0 %382
    %384 = vrot.lane.b32.xlu0 %v379, 64
    %v385 = vpop.permute.xlu0 %384
    %v388 = vadd.f32 %v248, %v383
    %v389 = vadd.f32 %v251, %v385
    %v390 = vtanh.pop %v388
    %v391 = vtanh.pop %v389
    %v392 = vsub.f32 1.0, %v356
    %v393 = vsub.f32 1.0, %v371
    %396 = vrot.lane.b32.xlu0 %v390, 96
    %v397 = vpop.permute.xlu0 %396
    %398 = vrot.lane.b32.xlu0 %v391, 96
    %v399 = vpop.permute.xlu0 %398
    %v402 = vmul.f32 %v392, %v397
    %v403 = vmul.f32 %v393, %v399
    %v404 = vmul.f32 %v356, %v199
    %v405 = vmul.f32 %v371, %v201
    %v406 = vadd.f32 %v402, %v404
    %v407 = vadd.f32 %v403, %v405
    %v408 = vpack.c.bf16 %v407, %v406
    %v409 = vld [vmem:[%s3] sm:$0xf]
    %411 = vrot.lane.b32.xlu0 %v408, 96
    %v412 = vpop.permute.xlu0 %411
    %v415 = vsel %vm178, %v409, 0
    %417 = vmatpush.bf16.msra.mxu0 0
    %418 = vmatpush.bf16.msra.mxu0 0
    %419 = vmatpush.bf16.msra.mxu0 0
    %420 = vmatpush.bf16.msra.mxu0 0
    %421 = vmatpush.bf16.msra.mxu0 0
    %422 = vmatpush.bf16.msra.mxu0 0
    %423 = vmatpush.bf16.msra.mxu0 0
    %424 = vmatpush.bf16.msra.mxu0 %v412
    %425 = vmatmul.bf16.gmra.mxu0 %v415
    %v426 = vpop.f32.mrf.mxu0
    %v427 = vadd.f32 0.0, %v426
    %v428 = vpop.f32.mrf.mxu0
    %429 = vdwg.mxu0
    %v430 = vld [vmem:[#allocation11] sm:$0xff]
    %v431 = vld [vmem:[#allocation11 + $0x8] sm:$0xff]
    %v432 = vld [vmem:[#allocation11 + $0x10] sm:$0xff]
    %v433 = vld [vmem:[#allocation11 + $0x18] sm:$0xff]
    %v435 = vsel %vm204, %v427, 0
    %437 = vmatpush.msra.mxu0 0.0
    %438 = vmatpush.msra.mxu0 0.0
    %439 = vmatpush.msra.mxu0 0.0
    %440 = vmatpush.msra.mxu0 0.0
    %441 = vmatpush.msra.mxu0 0.0
    %442 = vmatpush.msra.mxu0 0.0
    %443 = vmatpush.msra.mxu0 0.0
    %444 = vmatpush.msra.mxu0 0.0
    %445 = vmatpush.msra.mxu0 0.0
    %446 = vmatpush.msra.mxu0 0.0
    %447 = vmatpush.msra.mxu0 0.0
    %448 = vmatpush.msra.mxu0 0.0
    %449 = vmatpush.msra.mxu0 %v433
    %450 = vmatpush.msra.mxu0 %v432
    %451 = vmatpush.msra.mxu0 %v431
    %452 = vmatpush.msra.mxu0 %v430
    %453 = vmatmul.f32.gmra.mxu0 %v435
    %v454 = vpop.f32.mrf.mxu0
    %v455 = vadd.f32 0.0, %v454
    %456 = vdwg.mxu0
    %v457 = vld [vmem:[#allocation8] sm:$0xf]
    %v458 = vpack.c.bf16 %v455, %v455
    %v459 = vld [vmem:[#allocation12] sm:$0xff]
    %v460 = vld [vmem:[#allocation12 + $0x8] sm:$0xff]
    %v461 = vld [vmem:[#allocation12 + $0x10] sm:$0xff]
    %v462 = vld [vmem:[#allocation12 + $0x18] sm:$0xff]
    %v463 = vld [vmem:[%s7] sm:$0x1]
    %v465 = vperm.slane %v463, 0
    %469 = vrot.lane.b32.xlu0 %v406, 96
    %v470 = vpop.permute.xlu0 %469
    %471 = vrot.lane.b32.xlu0 %v407, 96
    %v472 = vpop.permute.xlu0 %471
    %v473 = vsel %vm204, %v470, 0
    %v475 = vsel %vm204, %v472, 0
    %477 = vmatpush.msra.mxu0 0.0
    %478 = vmatpush.msra.mxu0 0.0
    %479 = vmatpush.msra.mxu0 0.0
    %480 = vmatpush.msra.mxu0 0.0
    %481 = vmatpush.msra.mxu0 0.0
    %482 = vmatpush.msra.mxu0 0.0
    %483 = vmatpush.msra.mxu0 0.0
    %484 = vmatpush.msra.mxu0 0.0
    %485 = vmatpush.msra.mxu0 0.0
    %486 = vmatpush.msra.mxu0 0.0
    %487 = vmatpush.msra.mxu0 0.0
    %488 = vmatpush.msra.mxu0 0.0
    %489 = vmatpush.msra.mxu0 %v462
    %490 = vmatpush.msra.mxu0 %v461
    %491 = vmatpush.msra.mxu0 %v460
    %492 = vmatpush.msra.mxu0 %v459
    %493 = vmatmul.f32.gmra.mxu0 %v473
    %v494 = vpop.f32.mrf.mxu0
    %v495 = vadd.f32 %v465, %v494
    %496 = vmatmul.f32.gmra.mxu0 %v475
    %v497 = vpop.f32.mrf.mxu0
    %v498 = vadd.f32 %v465, %v497
    %499 = vdwg.mxu0
    %500 = vxpose.xlu0.c.b16.start [1/8] %v457, 128
    %501 = vxpose.xlu0.c.b16.cont [2/8] 0, 128
    %502 = vxpose.xlu0.c.b16.cont [3/8] 0, 128
    %503 = vxpose.xlu0.c.b16.cont [4/8] 0, 128
    %504 = vxpose.xlu0.c.b16.cont [5/8] 0, 128
    %505 = vxpose.xlu0.c.b16.cont [6/8] 0, 128
    %506 = vxpose.xlu0.c.b16.cont [7/8] 0, 128
    %507 = vxpose.xlu0.c.b16.end [8/8] 0, 128
    %v508 = vpop.trf.xlu0
    %v509 = vpop.trf.xlu0
    %v510 = vpop.trf.xlu0
    %v511 = vpop.trf.xlu0
    %v512 = vpop.trf.xlu0
    %v513 = vpop.trf.xlu0
    %v514 = vpop.trf.xlu0
    %v515 = vpop.trf.xlu0
    %vm516 = vcmask 64512
    %v518 = vsel %vm516, %v508, 0
    %vm520 = vcmask 1043456
    %v522 = vsel %vm520, %v458, 0
    %524 = vmatpush.bf16.msra.mxu0 0
    %525 = vmatpush.bf16.msra.mxu0 0
    %526 = vmatpush.bf16.msra.mxu0 0
    %527 = vmatpush.bf16.msra.mxu0 0
    %528 = vmatpush.bf16.msra.mxu0 0
    %529 = vmatpush.bf16.msra.mxu0 0
    %530 = vmatpush.bf16.msra.mxu0 0
    %531 = vmatpush.bf16.msra.mxu0 %v522
    %532 = vmatmul.bf16.gmra.mxu0 %v518
    %v533 = vpop.f32.mrf.mxu0
    %v534 = vadd.f32 %v495, %v533
    %v535 = vpop.f32.mrf.mxu0
    %v536 = vadd.f32 %v498, %v535
    %537 = vdwg.mxu0
    %v538 = vxor.u32 %v534, 2147483648
    %v539 = vxor.u32 %v536, 2147483648
    %v540 = vmul.f32 %v538, 1.442695
    %v541 = vpow.pop %v540
    %v542 = vmul.f32 %v539, 1.442695
    %v543 = vpow.pop %v542
    %v544 = vadd.f32 %v541, 1.0
    %v545 = vadd.f32 %v543, 1.0
    %v546 = vrcp.pop %v544
    %v547 = vmul.f32 %v544, %v546
    %v548 = vsub.f32 1.0, %v547
    %v549 = vmul.f32 %v546, %v548
    %v550 = vadd.f32 %v546, %v549
    %vm551 = vweird.f32 %v544
    %vm552 = vweird.f32 %v546
    %vm553 = vmor %vm551, %vm552
    %v554 = vsel %vm553, %v546, %v550
    %v555 = vand.u32 2147483647, %v544
    %vm556 = vcmp.eq.f32.partialorder %v555, 8.507059e+37
    %v557 = vand.u32 %v544, 2147483648
    %v558 = vor.u32 1.1754944e-38, %v557
    %v559 = vsel %vm556, %v558, %v554
    %v560 = vmul.f32 1.0, %v559
    %v561 = vrcp.pop %v545
    %v562 = vmul.f32 %v545, %v561
    %v563 = vsub.f32 1.0, %v562
    %v564 = vmul.f32 %v561, %v563
    %v565 = vadd.f32 %v561, %v564
    %vm566 = vweird.f32 %v545
    %vm567 = vweird.f32 %v561
    %vm568 = vmor %vm566, %vm567
    %v569 = vsel %vm568, %v561, %v565
    %v570 = vand.u32 2147483647, %v545
    %vm571 = vcmp.eq.f32.partialorder %v570, 8.507059e+37
    %v572 = vand.u32 %v545, 2147483648
    %v573 = vor.u32 1.1754944e-38, %v572
    %v574 = vsel %vm571, %v573, %v569
    %v575 = vmul.f32 1.0, %v574
    %v576 = vld [vmem:[%s8] sm:$0x1]
    %v578 = vperm.slane %v576, 0
    %v580 = vmul.f32 %v560, %v578
    %v581 = vmul.f32 %v575, %v578
    %v582 = vsel %vm204, %v580, 0.0
    %583 = vadd.xlane.f32.xlu0 %v582
    %v584 = vpop.xlane.xlu0 %583
    %v585 = vsel %vm204, %v581, 0.0
    %586 = vadd.xlane.f32.xlu0 %v585
    %v587 = vpop.xlane.xlu0 %586
    %v588 = vld [vmem:[#allocation2] sm:$0x1]
    %v590 = vperm.slane %v588, 0
    %v592 = vadd.f32 %v584, %v590
    %v593 = vadd.f32 %v587, %v590
    %595 = vset.pattern.permute.xlu0 0
    %596 = vperm.xlu0 %595, %v592
    %v597 = vpop.permute.xlu0 %596
    %600 = vset.pattern.permute.xlu0 0
    %601 = vperm.xlu0 %600, %v593
    %v602 = vpop.permute.xlu0 %601
    %v604 = vmul.f32 %v597, %v406
    %v605 = vmul.f32 %v602, %v407
    %v606 = vpack.c.bf16 %v605, %v604
    %608 = vrot.lane.b32.xlu0 %v606, 96
    %v609 = vpop.permute.xlu0 %608
    %v612 = vsel %vm178, %v457, 0
    %614 = vmatpush.bf16.msra.mxu0 0
    %615 = vmatpush.bf16.msra.mxu0 0
    %616 = vmatpush.bf16.msra.mxu0 0
    %617 = vmatpush.bf16.msra.mxu0 0
    %618 = vmatpush.bf16.msra.mxu0 0
    %619 = vmatpush.bf16.msra.mxu0 0
    %620 = vmatpush.bf16.msra.mxu0 0
    %621 = vmatpush.bf16.msra.mxu0 %v609
    %622 = vmatmul.bf16.gmra.mxu0 %v612
    %v623 = vpop.f32.mrf.mxu0
    %v624 = vadd.f32 0.0, %v623
    %v625 = vpop.f32.mrf.mxu0
    %626 = vdwg.mxu0
    %v627 = vld [vmem:[#allocation14] sm:$0xff]
    %v628 = vld [vmem:[#allocation14 + $0x8] sm:$0xff]
    %v629 = vld [vmem:[#allocation14 + $0x10] sm:$0xff]
    %v630 = vld [vmem:[#allocation14 + $0x18] sm:$0xff]
    %v631 = vld [vmem:[#allocation15] sm:$0xff]
    %v632 = vld [vmem:[#allocation15 + $0x8] sm:$0xff]
    %v633 = vld [vmem:[#allocation15 + $0x10] sm:$0xff]
    %v634 = vld [vmem:[#allocation15 + $0x18] sm:$0xff]
    %v636 = vsel %vm204, %v624, 0
    %638 = vmatpush.msra.mxu0 0.0
    %639 = vmatpush.msra.mxu0 0.0
    %640 = vmatpush.msra.mxu0 0.0
    %641 = vmatpush.msra.mxu0 0.0
    %642 = vmatpush.msra.mxu0 0.0
    %643 = vmatpush.msra.mxu0 0.0
    %644 = vmatpush.msra.mxu0 0.0
    %645 = vmatpush.msra.mxu0 0.0
    %646 = vmatpush.msra.mxu0 0.0
    %647 = vmatpush.msra.mxu0 0.0
    %648 = vmatpush.msra.mxu0 0.0
    %649 = vmatpush.msra.mxu0 0.0
    %650 = vmatpush.msra.mxu0 %v634
    %651 = vmatpush.msra.mxu0 %v633
    %652 = vmatpush.msra.mxu0 %v632
    %653 = vmatpush.msra.mxu0 %v631
    %654 = vmatmul.f32.gmra.mxu0 %v636
    %v655 = vpop.f32.mrf.mxu0
    %v656 = vadd.f32 0.0, %v655
    %657 = vdwg.mxu0
    %658 = vmatpush.msra.mxu0 0.0
    %659 = vmatpush.msra.mxu0 0.0
    %660 = vmatpush.msra.mxu0 0.0
    %661 = vmatpush.msra.mxu0 0.0
    %662 = vmatpush.msra.mxu0 0.0
    %663 = vmatpush.msra.mxu0 0.0
    %664 = vmatpush.msra.mxu0 0.0
    %665 = vmatpush.msra.mxu0 0.0
    %666 = vmatpush.msra.mxu0 0.0
    %667 = vmatpush.msra.mxu0 0.0
    %668 = vmatpush.msra.mxu0 0.0
    %669 = vmatpush.msra.mxu0 0.0
    %670 = vmatpush.msra.mxu0 %v630
    %671 = vmatpush.msra.mxu0 %v629
    %672 = vmatpush.msra.mxu0 %v628
    %673 = vmatpush.msra.mxu0 %v627
    %674 = vmatmul.f32.gmra.mxu0 %v435
    %v675 = vpop.f32.mrf.mxu0
    %v676 = vadd.f32 %v656, %v675
    %677 = vdwg.mxu0
    %678 = vst.msk [vmem:[#allocation17] sm:$0xff] %vm204, %v676
    // Predicated region
    $region82: #{tpu_custom_call.1} parent=1 // pred_check
      _
    $region83: #{tpu_custom_call.1} parent=1 // pred_check_branch
      %680 = sbr.rel (0) target = $region85
    $region84: #{tpu_custom_call.1} parent=1 // pred_region
      %682 = vsyncadd [#allocation5], 0
      %s684 = sshll.u32 [#allocation17], 4
      %s685 = int_to_ptr.vmem [resolvable:$true] %s684
      %s686 = sshll.u32 %s12, 4
      %s687 = int_to_ptr.hbm [resolvable:$true] %s686
      %689 = dma.vmem_to_hbm [thread:$0]  %s685, 128, %s687, [#allocation5]
    $region85: #{tpu_custom_call.1} parent=1 // pred_fallthru
      _
    // Predicated region
    $region86: #{tpu_custom_call.1} parent=1 // pred_check
      _
    $region87: #{tpu_custom_call.1} parent=1 // pred_check_branch
      %691 = sbr.rel (0) target = $region89
    $region88: #{tpu_custom_call.1} parent=1 // pred_region
      %693 = dma.done [#allocation5], 128
    $region89: #{tpu_custom_call.1} parent=1 // pred_fallthru
      _
    %694 = vsyncpa [#allocation4], 1
    %695 = vsyncpa [#allocation7], 1
    %696 = vsyncpa [#allocation10], 1
    %697 = vsyncpa [#allocation13], 1
    %698 = vsyncpa [#allocation16], 1
    %699 = vsyncpa [#allocation5], 1

</llo_original>
